<compile_context>
chip_gen: v7x
topology: tpu7x:2x2x1
jax: 0.10.0
libtpu: 0.0.40
codegen_flags: <defaults>
</compile_context>

<pallas_src>
import functools

import jax
import jax.numpy as jnp
from jax import lax
from jax.experimental import pallas as pl
from jax.experimental.pallas import tpu as pltpu

HIDDEN = 100       # logical hidden width (as in the PyTorch module)
HIDDEN_PAD = 128   # lane-aligned hidden width (zero-padded; zeros are exact)
W3_ROWS = 8        # w3^T padded to 8 sublanes (row 0 real) -> MXU lhs >= 8 rows


def _mlp_kernel(x_ref, w1_ref, b1_ref, w2_ref, b2_ref, w3_ref, b3_ref, o_ref):
    # fc1 -> relu: bf16 MXU operands, f32 accumulation; x cast in-kernel (VPU).
    x = x_ref[...].astype(jnp.bfloat16)
    h1 = jnp.dot(x, w1_ref[...], preferred_element_type=jnp.float32)
    h1 = jnp.maximum(h1 + b1_ref[...], 0.0)
    # fc2 -> relu
    h2 = jnp.dot(h1.astype(jnp.bfloat16), w2_ref[...],
                 preferred_element_type=jnp.float32)
    h2 = jnp.maximum(h2 + b2_ref[...], 0.0)
    # fc3 as an NT matmul (same pattern as attention's q @ k^T):
    #   w3 (8, 128) contracted with h2 (TB, 128) on the 128-lane axis -> (8, TB).
    # Row 0 holds the real output, lane-dense along the batch, so the store is
    # an unmasked lane-dense vst of only 4 B per batch row.
    out8 = lax.dot_general(w3_ref[...], h2.astype(jnp.bfloat16),
                           dimension_numbers=(((1,), (1,)), ((), ())),
                           preferred_element_type=jnp.float32)
    o_ref[...] = out8[0:1, :] + b3_ref[0, 0]


def _round_up(n, m):
    return ((n + m - 1) // m) * m


@functools.partial(jax.jit, static_argnames=("block_batch",))
def mlp_forward(x, params, *, block_batch=2048):
    """x: (B, input_dim) f32.  Returns (B, 1) f32."""
    w1, b1, w2, b2, w3, b3 = params
    B, D = x.shape

    # Batch tile: multiple of 128, capped so the double-buffered f32 x tile
    # stays <= ~8 MiB (comfortably inside the 32 MiB scoped-VMEM default on
    # v6e/v7x; sweep block_batch upward on v7x where per-step overhead
    # dominates harder).
    tb_cap = max(128, ((8 << 20) // (2 * 4 * D)) // 128 * 128)
    TB = min(block_batch, tb_cap, _round_up(B, 128))
    if B < TB:
        # Only tiny batches are padded (cheap).  Large batches use a partial
        # last block instead of re-materializing all of x with jnp.pad.
        x = jnp.pad(x, ((0, TB - B), (0, 0)))
    num_tiles = pl.cdiv(B, TB)
    b_pad = num_tiles * TB

    const = lambda i: (0, 0)  # weights stay VMEM-resident across batch tiles
    row = pl.pallas_call(
        _mlp_kernel,
        out_shape=jax.ShapeDtypeStruct((1, b_pad), jnp.float32),
        grid_spec=pltpu.PrefetchScalarGridSpec(
            num_scalar_prefetch=0,
            grid=(num_tiles,),
            in_specs=[
                pl.BlockSpec((TB, D), lambda i: (i, 0)),             # x tile (f32)
                pl.BlockSpec((D, HIDDEN_PAD), const),                # w1
                pl.BlockSpec((1, HIDDEN_PAD), const),                # b1
                pl.BlockSpec((HIDDEN_PAD, HIDDEN_PAD), const),       # w2
                pl.BlockSpec((1, HIDDEN_PAD), const),                # b2
                pl.BlockSpec((W3_ROWS, HIDDEN_PAD), const),          # w3^T (padded)
                pl.BlockSpec(memory_space=pltpu.MemorySpace.SMEM),   # b3 scalar
            ],
            out_specs=pl.BlockSpec((1, TB), lambda i: (0, i)),
        ),
        compiler_params=pltpu.CompilerParams(
            dimension_semantics=("parallel",)),
    )(x, w1, b1, w2, b2, w3, b3)

    # Lane-dense (1, b_pad) row -> (B, 1); padded/garbage columns dropped here.
    return row[0, :B].reshape(B, 1)


def _xavier_uniform(key, fan_in, fan_out):
    # Matches torch.nn.init.xavier_uniform_ (gain=1); sampled (out, in) like a
    # torch weight, then transposed to (in, out) so the kernel does x @ W.
    limit = float(jnp.sqrt(6.0 / (fan_in + fan_out)))
    w = jax.random.uniform(key, (fan_out, fan_in), jnp.float32,
                           minval=-limit, maxval=limit)
    return w.T


def init_mlp_params(key, input_dim, *, weight_dtype=jnp.bfloat16):
    k1, k2, k3 = jax.random.split(key, 3)
    w1 = _xavier_uniform(k1, input_dim, HIDDEN)   # (D, 100)
    w2 = _xavier_uniform(k2, HIDDEN, HIDDEN)      # (100, 100)
    w3 = _xavier_uniform(k3, HIDDEN, 1)           # (100, 1)
    # Zero-pad to lane-aligned widths; zeros keep the math exact.
    w1p = jnp.zeros((input_dim, HIDDEN_PAD), jnp.float32).at[:, :HIDDEN].set(w1)
    w2p = jnp.zeros((HIDDEN_PAD, HIDDEN_PAD), jnp.float32).at[:HIDDEN, :HIDDEN].set(w2)
    # w3 stored transposed, row 0 real, rows 1..7 zero (MXU lhs padded to 8 rows).
    w3p = jnp.zeros((W3_ROWS, HIDDEN_PAD), jnp.float32).at[0, :HIDDEN].set(w3[:, 0])
    # TODO(synk): torch nn.Linear default bias init is U(+/-1/sqrt(fan_in));
    # zeros kept as a deterministic stand-in (xavier_uniform_ only touches weights).
    b1 = jnp.zeros((1, HIDDEN_PAD), jnp.float32)
    b2 = jnp.zeros((1, HIDDEN_PAD), jnp.float32)
    b3 = jnp.zeros((1, 1), jnp.float32)
    return (w1p.astype(weight_dtype), b1,
            w2p.astype(weight_dtype), b2,
            w3p.astype(weight_dtype), b3)


if __name__ == "__main__":
    key = jax.random.PRNGKey(0)
    kx, kp = jax.random.split(key)

    batch, input_dim = 8, 32
    x = jax.random.normal(kx, (batch, input_dim), jnp.float32)
    params = init_mlp_params(kp, input_dim)

    out = mlp_forward(x, params)
    jax.block_until_ready(out)

    # Reference: same math (bf16 operands, f32 accumulation) in plain JAX.
    w1, b1, w2, b2, w3, b3 = params
    xb = x.astype(jnp.bfloat16)
    h1 = jnp.maximum(jnp.dot(xb, w1, preferred_element_type=jnp.float32) + b1, 0.0)
    h2 = jnp.maximum(jnp.dot(h1.astype(jnp.bfloat16), w2,
                             preferred_element_type=jnp.float32) + b2, 0.0)
    ref = jnp.dot(h2.astype(jnp.bfloat16), w3.T,
                  preferred_element_type=jnp.float32)[:, :1] + b3[0, 0]

    assert out.shape == (batch, 1)
    err = float(jnp.max(jnp.abs(out - ref)))
    assert jnp.allclose(out, ref, atol=1e-4, rtol=1e-4), err
    print("KERNEL_OK")
</pallas_src>

<mosaic_0001>
module attributes {stable_mosaic.version = 11 : i64} {
  func.func @_mlp_kernel(%arg0: i32, %arg1: memref<128x32xf32, #tpu.memory_space<vmem>>, %arg2: memref<32x128xbf16, #tpu.memory_space<vmem>>, %arg3: memref<1x128xf32, #tpu.memory_space<vmem>>, %arg4: memref<128x128xbf16, #tpu.memory_space<vmem>>, %arg5: memref<1x128xf32, #tpu.memory_space<vmem>>, %arg6: memref<8x128xbf16, #tpu.memory_space<vmem>>, %arg7: memref<1x1xf32, #tpu.memory_space<smem>>, %arg8: memref<1x128xf32, #tpu.memory_space<vmem>>) attributes {dimension_semantics = [#tpu.dimension_semantics<parallel>], iteration_bounds = array<i64: 1>, scalar_prefetch = 0 : i64, scratch_operands = 0 : i64, tpu.core_type = #tpu.core_type<tc>, window_params = [{transform_indices = @transform_0, window_bounds = array<i64: 128, 32>}, {pipeline_mode = #tpu.pipeline_mode<synchronous>, transform_indices = @transform_1, window_bounds = array<i64: 32, 128>}, {pipeline_mode = #tpu.pipeline_mode<synchronous>, transform_indices = @transform_2, window_bounds = array<i64: 1, 128>}, {pipeline_mode = #tpu.pipeline_mode<synchronous>, transform_indices = @transform_3, window_bounds = array<i64: 128, 128>}, {pipeline_mode = #tpu.pipeline_mode<synchronous>, transform_indices = @transform_4, window_bounds = array<i64: 1, 128>}, {pipeline_mode = #tpu.pipeline_mode<synchronous>, transform_indices = @transform_5, window_bounds = array<i64: 8, 128>}, {transform_indices = @transform_6, window_bounds = array<i64: 1, 1>}, {transform_indices = @transform_7, window_bounds = array<i64: 1, 128>}]} {
    %c0 = arith.constant 0 : index
    %c0_0 = arith.constant 0 : index
    %0 = vector.load %arg1[%c0, %c0_0] : memref<128x32xf32, #tpu.memory_space<vmem>>, vector<128x32xf32>
    %1 = arith.truncf %0 : vector<128x32xf32> to vector<128x32xbf16>
    %c0_1 = arith.constant 0 : index
    %c0_2 = arith.constant 0 : index
    %2 = vector.load %arg2[%c0_1, %c0_2] : memref<32x128xbf16, #tpu.memory_space<vmem>>, vector<32x128xbf16>
    %cst = arith.constant dense<0.000000e+00> : vector<128x128xf32>
    %3 = tpu.matmul %1, %2, %cst {dimension_numbers = #tpu.dot_dimension_numbers<[1], [0], [0], [1], [0, 0, 1, 1], [], []>} : vector<128x32xbf16>, vector<32x128xbf16>, vector<128x128xf32> -> vector<128x128xf32>
    %c0_3 = arith.constant 0 : index
    %c0_4 = arith.constant 0 : index
    %4 = vector.load %arg3[%c0_3, %c0_4] : memref<1x128xf32, #tpu.memory_space<vmem>>, vector<1x128xf32>
    %5 = vector.broadcast %4 : vector<1x128xf32> to vector<128x128xf32>
    %6 = arith.addf %3, %5 : vector<128x128xf32>
    %cst_5 = arith.constant 0.000000e+00 : f32
    %7 = vector.broadcast %cst_5 : f32 to vector<128x128xf32>
    %8 = arith.maximumf %6, %7 : vector<128x128xf32>
    %9 = arith.truncf %8 : vector<128x128xf32> to vector<128x128xbf16>
    %c0_6 = arith.constant 0 : index
    %c0_7 = arith.constant 0 : index
    %10 = vector.load %arg4[%c0_6, %c0_7] : memref<128x128xbf16, #tpu.memory_space<vmem>>, vector<128x128xbf16>
    %cst_8 = arith.constant dense<0.000000e+00> : vector<128x128xf32>
    %11 = tpu.matmul %9, %10, %cst_8 {dimension_numbers = #tpu.dot_dimension_numbers<[1], [0], [0], [1], [0, 0, 1, 1], [], []>} : vector<128x128xbf16>, vector<128x128xbf16>, vector<128x128xf32> -> vector<128x128xf32>
    %c0_9 = arith.constant 0 : index
    %c0_10 = arith.constant 0 : index
    %12 = vector.load %arg5[%c0_9, %c0_10] : memref<1x128xf32, #tpu.memory_space<vmem>>, vector<1x128xf32>
    %13 = vector.broadcast %12 : vector<1x128xf32> to vector<128x128xf32>
    %14 = arith.addf %11, %13 : vector<128x128xf32>
    %cst_11 = arith.constant 0.000000e+00 : f32
    %15 = vector.broadcast %cst_11 : f32 to vector<128x128xf32>
    %16 = arith.maximumf %14, %15 : vector<128x128xf32>
    %c0_12 = arith.constant 0 : index
    %c0_13 = arith.constant 0 : index
    %17 = vector.load %arg6[%c0_12, %c0_13] : memref<8x128xbf16, #tpu.memory_space<vmem>>, vector<8x128xbf16>
    %18 = arith.truncf %16 : vector<128x128xf32> to vector<128x128xbf16>
    %cst_14 = arith.constant dense<0.000000e+00> : vector<8x128xf32>
    %19 = tpu.matmul %17, %18, %cst_14 {dimension_numbers = #tpu.dot_dimension_numbers<[1], [1], [0], [0], [0, 0, 1, 0], [], []>} : vector<8x128xbf16>, vector<128x128xbf16>, vector<8x128xf32> -> vector<8x128xf32>
    %20 = vector.extract_strided_slice %19 {offsets = [0, 0], sizes = [1, 128], strides = [1, 1]} : vector<8x128xf32> to vector<1x128xf32>
    %c0_15 = arith.constant 0 : index
    %c0_16 = arith.constant 0 : index
    %21 = memref.load %arg7[%c0_15, %c0_16] : memref<1x1xf32, #tpu.memory_space<smem>>
    %22 = vector.broadcast %21 : f32 to vector<1x128xf32>
    %23 = arith.addf %20, %22 : vector<1x128xf32>
    %c0_17 = arith.constant 0 : index
    %c0_18 = arith.constant 0 : index
    %24 = vector.load %arg8[%c0_17, %c0_18] : memref<1x128xf32, #tpu.memory_space<vmem>>, vector<1x128xf32>
    tpu.vector_store %arg8[%c0_17, %c0_18], %23 {strides = array<i32>} : memref<1x128xf32, #tpu.memory_space<vmem>>, vector<1x128xf32>,
    return
  }
  func.func @transform_0(%arg0: i32) -> (i32, i32) {
    %c0_i32 = arith.constant 0 : i32
    %c0_i32_0 = arith.constant 0 : i32
    return %arg0, %c0_i32 : i32, i32
  }
  func.func @transform_1(%arg0: i32) -> (i32, i32) {
    %c0_i32 = arith.constant 0 : i32
    %c0_i32_0 = arith.constant 0 : i32
    %c0_i32_1 = arith.constant 0 : i32
    return %c0_i32, %c0_i32_0 : i32, i32
  }
  func.func @transform_2(%arg0: i32) -> (i32, i32) {
    %c0_i32 = arith.constant 0 : i32
    %c0_i32_0 = arith.constant 0 : i32
    %c0_i32_1 = arith.constant 0 : i32
    return %c0_i32, %c0_i32_0 : i32, i32
  }
  func.func @transform_3(%arg0: i32) -> (i32, i32) {
    %c0_i32 = arith.constant 0 : i32
    %c0_i32_0 = arith.constant 0 : i32
    %c0_i32_1 = arith.constant 0 : i32
    return %c0_i32, %c0_i32_0 : i32, i32
  }
  func.func @transform_4(%arg0: i32) -> (i32, i32) {
    %c0_i32 = arith.constant 0 : i32
    %c0_i32_0 = arith.constant 0 : i32
    %c0_i32_1 = arith.constant 0 : i32
    return %c0_i32, %c0_i32_0 : i32, i32
  }
  func.func @transform_5(%arg0: i32) -> (i32, i32) {
    %c0_i32 = arith.constant 0 : i32
    %c0_i32_0 = arith.constant 0 : i32
    %c0_i32_1 = arith.constant 0 : i32
    return %c0_i32, %c0_i32_0 : i32, i32
  }
  func.func @transform_6(%arg0: i32) -> (i32, i32) {
    %c0_i32 = arith.constant 0 : i32
    %c0_i32_0 = arith.constant 0 : i32
    %c0_i32_1 = arith.constant 0 : i32
    return %c0_i32, %c0_i32_0 : i32, i32
  }
  func.func @transform_7(%arg0: i32) -> (i32, i32) {
    %c0_i32 = arith.constant 0 : i32
    %c0_i32_0 = arith.constant 0 : i32
    return %c0_i32, %arg0 : i32, i32
  }
}

</mosaic_0001>

<llo_original>
// kernel: mlp_forward.1
$region0: #{mlp_forward.1}
  #allocation0 [shape = 'u32[]', space=smem, size = 0x4, offset = 0x4, fixed_abs, tag = 'smem constant byte address 0x4 - core index']
  #allocation1 [shape = 'u32[144,128]{1,0:T(1,128)}', space=vmem, size = 0x12000, scoped, tag = 'internal scratch']
  #allocation2 [shape = 'f32[1,1]{1,0:T(1,128)S(6)}', space=smem, size = 0x200, scoped, tag = 'scoped memory for mlp_forward.1']
  %s0 = inlined_call_operand.vmem [shape: f32[128,32], index: 0, kind: input, shape index: {}]
  %s1 = inlined_call_operand.vmem [shape: bf16[32,128], index: 1, kind: input, shape index: {}]
  %s2 = inlined_call_operand.vmem [shape: f32[1,128], index: 2, kind: input, shape index: {}]
  %s3 = inlined_call_operand.vmem [shape: bf16[128,128], index: 3, kind: input, shape index: {}]
  %s4 = inlined_call_operand.vmem [shape: f32[1,128], index: 4, kind: input, shape index: {}]
  %s5 = inlined_call_operand.vmem [shape: bf16[8,128], index: 5, kind: input, shape index: {}]
  %s6 = inlined_call_operand.<no memory space> [shape: f32[1,1], index: 6, kind: input, shape index: {}]
  %s7 = inlined_call_operand.vmem [shape: f32[1,128], index: 7, kind: output, shape index: {}]
  %s8 = sld [smem:[#allocation0]]
  $region38: #{mlp_forward.1} parent=0
    _
  %s10 = ssub.s32 1, %s8
  %s11 = scalar_select 0, %s10, %s8
  %12 = sst [smem:[#allocation2]] %s6
  // Predicated region
  $region2: #{mlp_forward.1} parent=0 // pred_check
    _
  $region3: #{mlp_forward.1} parent=0 // pred_check_branch
    %14 = sbr.rel (0) target = $region5
  $region4: #{mlp_forward.1} parent=0 // pred_region
    _
  $region5: #{mlp_forward.1} parent=0 // pred_fallthru
    _
  // Predicated region
  $region6: #{mlp_forward.1} parent=0 // pred_check
    _
  $region7: #{mlp_forward.1} parent=0 // pred_check_branch
    %16 = sbr.rel (0) target = $region9
  $region8: #{mlp_forward.1} parent=0 // pred_region
    _
  $region9: #{mlp_forward.1} parent=0 // pred_fallthru
    _
  // Predicated region
  $region10: #{mlp_forward.1} parent=0 // pred_check
    _
  $region11: #{mlp_forward.1} parent=0 // pred_check_branch
    %18 = sbr.rel (0) target = $region13
  $region12: #{mlp_forward.1} parent=0 // pred_region
    _
  $region13: #{mlp_forward.1} parent=0 // pred_fallthru
    _
  // Predicated region
  $region14: #{mlp_forward.1} parent=0 // pred_check
    _
  $region15: #{mlp_forward.1} parent=0 // pred_check_branch
    %20 = sbr.rel (0) target = $region17
  $region16: #{mlp_forward.1} parent=0 // pred_region
    _
  $region17: #{mlp_forward.1} parent=0 // pred_fallthru
    _
  // Predicated region
  $region18: #{mlp_forward.1} parent=0 // pred_check
    _
  $region19: #{mlp_forward.1} parent=0 // pred_check_branch
    %22 = sbr.rel (0) target = $region21
  $region20: #{mlp_forward.1} parent=0 // pred_region
    _
  $region21: #{mlp_forward.1} parent=0 // pred_fallthru
    _
  // Predicated region
  $region22: #{mlp_forward.1} parent=0 // pred_check
    _
  $region23: #{mlp_forward.1} parent=0 // pred_check_branch
    %24 = sbr.rel (0) target = $region25
  $region24: #{mlp_forward.1} parent=0 // pred_region
    _
  $region25: #{mlp_forward.1} parent=0 // pred_fallthru
    _
  // Predicated region
  $region26: #{mlp_forward.1} parent=0 // pred_check
    _
  $region27: #{mlp_forward.1} parent=0 // pred_check_branch
    %26 = sbr.rel (0) target = $region29
  $region28: #{mlp_forward.1} parent=0 // pred_region
    _
  $region29: #{mlp_forward.1} parent=0 // pred_fallthru
    _
  %v28 = vld [vmem:[%s0] sm:$0xff]
  %v29 = vld [vmem:[%s0 + $0x8] sm:$0xff]
  %v30 = vld [vmem:[%s0 + $0x10] sm:$0xff]
  %v31 = vld [vmem:[%s0 + $0x18] sm:$0xff]
  %v32 = vld [vmem:[%s0 + $0x20] sm:$0xff]
  %v33 = vld [vmem:[%s0 + $0x28] sm:$0xff]
  %v34 = vld [vmem:[%s0 + $0x30] sm:$0xff]
  %v35 = vld [vmem:[%s0 + $0x38] sm:$0xff]
  %v36 = vld [vmem:[%s0 + $0x40] sm:$0xff]
  %v37 = vld [vmem:[%s0 + $0x48] sm:$0xff]
  %v38 = vld [vmem:[%s0 + $0x50] sm:$0xff]
  %v39 = vld [vmem:[%s0 + $0x58] sm:$0xff]
  %v40 = vld [vmem:[%s0 + $0x60] sm:$0xff]
  %v41 = vld [vmem:[%s0 + $0x68] sm:$0xff]
  %v42 = vld [vmem:[%s0 + $0x70] sm:$0xff]
  %v43 = vld [vmem:[%s0 + $0x78] sm:$0xff]
  %v44 = vpack.c.bf16 %v29, %v28
  %v45 = vpack.c.bf16 %v31, %v30
  %v46 = vpack.c.bf16 %v33, %v32
  %v47 = vpack.c.bf16 %v35, %v34
  %v48 = vpack.c.bf16 %v37, %v36
  %v49 = vpack.c.bf16 %v39, %v38
  %v50 = vpack.c.bf16 %v41, %v40
  %v51 = vpack.c.bf16 %v43, %v42
  %v52 = vld [vmem:[%s1] sm:$0xf]
  %v53 = vld [vmem:[%s1 + $0x4] sm:$0xf]
  %v54 = vld [vmem:[%s1 + $0x8] sm:$0xf]
  %v55 = vld [vmem:[%s1 + $0xc] sm:$0xf]
  %v56 = vld [vmem:[%s2] sm:$0x1]
  %v58 = vlaneseq
  %v59 = vshrl.u32 %v58, 7
  %v60 = vsub.s32 0, %v59
  %v61 = vrot.slane %v56, %v60
  %v67 = vunpack.c.l.b16 %v52
  %v68 = vunpack.c.l.b16 %v53
  %v69 = vunpack.c.l.b16 %v54
  %v70 = vunpack.c.l.b16 %v55
  %v71 = vpack.c.b16 %v68, %v67
  %v72 = vpack.c.b16 %v70, %v69
  %vm75 = vcmask 261120
  %v77 = vsel %vm75, %v44, 0
  %v80 = vsel %vm75, %v45, 0
  %v83 = vsel %vm75, %v46, 0
  %v86 = vsel %vm75, %v47, 0
  %v89 = vsel %vm75, %v48, 0
  %v92 = vsel %vm75, %v49, 0
  %v95 = vsel %vm75, %v50, 0
  %v98 = vsel %vm75, %v51, 0
  %100 = vmatprep.subr.bf16.mxu0 0
  %101 = vmatpush1.bf16.msra.mxu0 %v71
  %102 = vmatprep.subr.bf16.mxu0 0
  %103 = vmatpush1.bf16.msra.mxu0 %v72
  %104 = vmatprep.subr.bf16.mxu0 0
  %105 = vmatpush1.bf16.msra.mxu0 0
  %106 = vmatprep.subr.bf16.mxu0 0
  %107 = vmatpush1.bf16.msra.mxu0 0
  %108 = vmatprep.subr.bf16.mxu0 0
  %109 = vmatpush1.bf16.msra.mxu0 0
  %110 = vmatprep.subr.bf16.mxu0 0
  %111 = vmatpush1.bf16.msra.mxu0 0
  %112 = vmatprep.subr.bf16.mxu0 0
  %113 = vmatpush1.bf16.msra.mxu0 0
  %114 = vmatprep.subr.bf16.mxu0 0
  %115 = vmatpush1.bf16.msra.mxu0 0
  %116 = vmatprep.subr.bf16.mxu0 0
  %117 = vmatpush1.bf16.msra.mxu0 0
  %118 = vmatprep.subr.bf16.mxu0 0
  %119 = vmatpush1.bf16.msra.mxu0 0
  %120 = vmatprep.subr.bf16.mxu0 0
  %121 = vmatpush1.bf16.msra.mxu0 0
  %122 = vmatprep.subr.bf16.mxu0 0
  %123 = vmatpush1.bf16.msra.mxu0 0
  %124 = vmatprep.subr.bf16.mxu0 0
  %125 = vmatpush1.bf16.msra.mxu0 0
  %126 = vmatprep.subr.bf16.mxu0 0
  %127 = vmatpush1.bf16.msra.mxu0 0
  %128 = vmatprep.subr.bf16.mxu0 0
  %129 = vmatpush1.bf16.msra.mxu0 0
  %130 = vmatprep.subr.bf16.mxu0 0
  %131 = vmatpush1.bf16.msra.mxu0 0
  %132 = vmatprep.mubr.bf16.mxu0 0
  %133 = vmatmul.mubr.bf16.gmra.mrb[0].mxu0 %v77
  %v134 = vpop.f32.mrb[0].mxu0
  %v135 = vadd.f32 %v61, %v134
  %v136 = vpop.f32.mrb[0].mxu0
  %v137 = vpop.f32.mrb[0].mxu0
  %v138 = vadd.f32 %v61, %v137
  %v139 = vpop.f32.mrb[0].mxu0
  %140 = vmatprep.mubr.bf16.mxu0 0
  %141 = vmatmul.mubr.bf16.gmra.mrb[0].mxu0 %v80
  %v142 = vpop.f32.mrb[0].mxu0
  %v143 = vadd.f32 %v61, %v142
  %v144 = vpop.f32.mrb[0].mxu0
  %v145 = vpop.f32.mrb[0].mxu0
  %v146 = vadd.f32 %v61, %v145
  %v147 = vpop.f32.mrb[0].mxu0
  %148 = vmatprep.mubr.bf16.mxu0 0
  %149 = vmatmul.mubr.bf16.gmra.mrb[0].mxu0 %v83
  %v150 = vpop.f32.mrb[0].mxu0
  %v151 = vadd.f32 %v61, %v150
  %v152 = vpop.f32.mrb[0].mxu0
  %v153 = vpop.f32.mrb[0].mxu0
  %v154 = vadd.f32 %v61, %v153
  %v155 = vpop.f32.mrb[0].mxu0
  %156 = vmatprep.mubr.bf16.mxu0 0
  %157 = vmatmul.mubr.bf16.gmra.mrb[0].mxu0 %v86
  %v158 = vpop.f32.mrb[0].mxu0
  %v159 = vadd.f32 %v61, %v158
  %v160 = vpop.f32.mrb[0].mxu0
  %v161 = vpop.f32.mrb[0].mxu0
  %v162 = vadd.f32 %v61, %v161
  %v163 = vpop.f32.mrb[0].mxu0
  %164 = vmatprep.mubr.bf16.mxu0 0
  %165 = vmatmul.mubr.bf16.gmra.mrb[0].mxu0 %v89
  %v166 = vpop.f32.mrb[0].mxu0
  %v167 = vadd.f32 %v61, %v166
  %v168 = vpop.f32.mrb[0].mxu0
  %v169 = vpop.f32.mrb[0].mxu0
  %v170 = vadd.f32 %v61, %v169
  %v171 = vpop.f32.mrb[0].mxu0
  %172 = vmatprep.mubr.bf16.mxu0 0
  %173 = vmatmul.mubr.bf16.gmra.mrb[0].mxu0 %v92
  %v174 = vpop.f32.mrb[0].mxu0
  %v175 = vadd.f32 %v61, %v174
  %v176 = vpop.f32.mrb[0].mxu0
  %v177 = vpop.f32.mrb[0].mxu0
  %v178 = vadd.f32 %v61, %v177
  %v179 = vpop.f32.mrb[0].mxu0
  %180 = vmatprep.mubr.bf16.mxu0 0
  %181 = vmatmul.mubr.bf16.gmra.mrb[0].mxu0 %v95
  %v182 = vpop.f32.mrb[0].mxu0
  %v183 = vadd.f32 %v61, %v182
  %v184 = vpop.f32.mrb[0].mxu0
  %v185 = vpop.f32.mrb[0].mxu0
  %v186 = vadd.f32 %v61, %v185
  %v187 = vpop.f32.mrb[0].mxu0
  %188 = vmatprep.mubr.bf16.mxu0 0
  %189 = vmatmul.mubr.bf16.gmra.mrb[0].mxu0 %v98
  %v190 = vpop.f32.mrb[0].mxu0
  %v191 = vadd.f32 %v61, %v190
  %v192 = vpop.f32.mrb[0].mxu0
  %v193 = vpop.f32.mrb[0].mxu0
  %v194 = vadd.f32 %v61, %v193
  %v195 = vpop.f32.mrb[0].mxu0
  %196 = vdwg.mxu0
  %v197 = vmax.f32 %v135, 0.0
  %v198 = vmax.f32 %v138, 0.0
  %v199 = vmax.f32 %v143, 0.0
  %v200 = vmax.f32 %v146, 0.0
  %v201 = vmax.f32 %v151, 0.0
  %v202 = vmax.f32 %v154, 0.0
  %v203 = vmax.f32 %v159, 0.0
  %v204 = vmax.f32 %v162, 0.0
  %v205 = vmax.f32 %v167, 0.0
  %v206 = vmax.f32 %v170, 0.0
  %v207 = vmax.f32 %v175, 0.0
  %v208 = vmax.f32 %v178, 0.0
  %v209 = vmax.f32 %v183, 0.0
  %v210 = vmax.f32 %v186, 0.0
  %v211 = vmax.f32 %v191, 0.0
  %v212 = vmax.f32 %v194, 0.0
  %v213 = vpack.c.bf16 %v198, %v197
  %v214 = vpack.c.bf16 %v200, %v199
  %v215 = vpack.c.bf16 %v202, %v201
  %v216 = vpack.c.bf16 %v204, %v203
  %v217 = vpack.c.bf16 %v206, %v205
  %v218 = vpack.c.bf16 %v208, %v207
  %v219 = vpack.c.bf16 %v210, %v209
  %v220 = vpack.c.bf16 %v212, %v211
  %v221 = vld [vmem:[%s3] sm:$0xf]
  %v222 = vld [vmem:[%s3 + $0x4] sm:$0xf]
  %v223 = vld [vmem:[%s3 + $0x8] sm:$0xf]
  %v224 = vld [vmem:[%s3 + $0xc] sm:$0xf]
  %v225 = vld [vmem:[%s3 + $0x10] sm:$0xf]
  %v226 = vld [vmem:[%s3 + $0x14] sm:$0xf]
  %v227 = vld [vmem:[%s3 + $0x18] sm:$0xf]
  %v228 = vld [vmem:[%s3 + $0x1c] sm:$0xf]
  %v229 = vld [vmem:[%s3 + $0x20] sm:$0xf]
  %v230 = vld [vmem:[%s3 + $0x24] sm:$0xf]
  %v231 = vld [vmem:[%s3 + $0x28] sm:$0xf]
  %v232 = vld [vmem:[%s3 + $0x2c] sm:$0xf]
  %v233 = vld [vmem:[%s3 + $0x30] sm:$0xf]
  %v234 = vld [vmem:[%s3 + $0x34] sm:$0xf]
  %v235 = vld [vmem:[%s3 + $0x38] sm:$0xf]
  %v236 = vld [vmem:[%s3 + $0x3c] sm:$0xf]
  %v237 = vld [vmem:[%s4] sm:$0x1]
  %v239 = vlaneseq
  %v240 = vshrl.u32 %v239, 7
  %v241 = vsub.s32 0, %v240
  %v242 = vrot.slane %v237, %v241
  %v260 = vunpack.c.l.b16 %v221
  %v261 = vunpack.c.l.b16 %v222
  %v262 = vunpack.c.l.b16 %v223
  %v263 = vunpack.c.l.b16 %v224
  %v264 = vunpack.c.l.b16 %v225
  %v265 = vunpack.c.l.b16 %v226
  %v266 = vunpack.c.l.b16 %v227
  %v267 = vunpack.c.l.b16 %v228
  %v268 = vunpack.c.l.b16 %v229
  %v269 = vunpack.c.l.b16 %v230
  %v270 = vunpack.c.l.b16 %v231
  %v271 = vunpack.c.l.b16 %v232
  %v272 = vunpack.c.l.b16 %v233
  %v273 = vunpack.c.l.b16 %v234
  %v274 = vunpack.c.l.b16 %v235
  %v275 = vunpack.c.l.b16 %v236
  %v276 = vpack.c.b16 %v261, %v260
  %v277 = vpack.c.b16 %v263, %v262
  %v278 = vpack.c.b16 %v265, %v264
  %v279 = vpack.c.b16 %v267, %v266
  %v280 = vpack.c.b16 %v269, %v268
  %v281 = vpack.c.b16 %v271, %v270
  %v282 = vpack.c.b16 %v273, %v272
  %v283 = vpack.c.b16 %v275, %v274
  %292 = vmatprep.subr.bf16.mxu0 0
  %293 = vmatpush1.bf16.msra.mxu0 %v276
  %294 = vmatprep.subr.bf16.mxu0 0
  %295 = vmatpush1.bf16.msra.mxu0 %v277
  %296 = vmatprep.subr.bf16.mxu0 0
  %297 = vmatpush1.bf16.msra.mxu0 %v278
  %298 = vmatprep.subr.bf16.mxu0 0
  %299 = vmatpush1.bf16.msra.mxu0 %v279
  %300 = vmatprep.subr.bf16.mxu0 0
  %301 = vmatpush1.bf16.msra.mxu0 %v280
  %302 = vmatprep.subr.bf16.mxu0 0
  %303 = vmatpush1.bf16.msra.mxu0 %v281
  %304 = vmatprep.subr.bf16.mxu0 0
  %305 = vmatpush1.bf16.msra.mxu0 %v282
  %306 = vmatprep.subr.bf16.mxu0 0
  %307 = vmatpush1.bf16.msra.mxu0 %v283
  %308 = vmatprep.subr.bf16.mxu0 0
  %309 = vmatpush1.bf16.msra.mxu0 0
  %310 = vmatprep.subr.bf16.mxu0 0
  %311 = vmatpush1.bf16.msra.mxu0 0
  %312 = vmatprep.subr.bf16.mxu0 0
  %313 = vmatpush1.bf16.msra.mxu0 0
  %314 = vmatprep.subr.bf16.mxu0 0
  %315 = vmatpush1.bf16.msra.mxu0 0
  %316 = vmatprep.subr.bf16.mxu0 0
  %317 = vmatpush1.bf16.msra.mxu0 0
  %318 = vmatprep.subr.bf16.mxu0 0
  %319 = vmatpush1.bf16.msra.mxu0 0
  %320 = vmatprep.subr.bf16.mxu0 0
  %321 = vmatpush1.bf16.msra.mxu0 0
  %322 = vmatprep.subr.bf16.mxu0 0
  %323 = vmatpush1.bf16.msra.mxu0 0
  %324 = vmatprep.mubr.bf16.mxu0 0
  %325 = vmatmul.mubr.bf16.gmra.mrb[0].mxu0 %v213
  %v326 = vpop.f32.mrb[0].mxu0
  %v327 = vadd.f32 %v242, %v326
  %v328 = vpop.f32.mrb[0].mxu0
  %v329 = vpop.f32.mrb[0].mxu0
  %v330 = vadd.f32 %v242, %v329
  %v331 = vpop.f32.mrb[0].mxu0
  %332 = vmatprep.mubr.bf16.mxu0 0
  %333 = vmatmul.mubr.bf16.gmra.mrb[0].mxu0 %v214
  %v334 = vpop.f32.mrb[0].mxu0
  %v335 = vadd.f32 %v242, %v334
  %v336 = vpop.f32.mrb[0].mxu0
  %v337 = vpop.f32.mrb[0].mxu0
  %v338 = vadd.f32 %v242, %v337
  %v339 = vpop.f32.mrb[0].mxu0
  %340 = vmatprep.mubr.bf16.mxu0 0
  %341 = vmatmul.mubr.bf16.gmra.mrb[0].mxu0 %v215
  %v342 = vpop.f32.mrb[0].mxu0
  %v343 = vadd.f32 %v242, %v342
  %v344 = vpop.f32.mrb[0].mxu0
  %v345 = vpop.f32.mrb[0].mxu0
  %v346 = vadd.f32 %v242, %v345
  %v347 = vpop.f32.mrb[0].mxu0
  %348 = vmatprep.mubr.bf16.mxu0 0
  %349 = vmatmul.mubr.bf16.gmra.mrb[0].mxu0 %v216
  %v350 = vpop.f32.mrb[0].mxu0
  %v351 = vadd.f32 %v242, %v350
  %v352 = vpop.f32.mrb[0].mxu0
  %v353 = vpop.f32.mrb[0].mxu0
  %v354 = vadd.f32 %v242, %v353
  %v355 = vpop.f32.mrb[0].mxu0
  %356 = vmatprep.mubr.bf16.mxu0 0
  %357 = vmatmul.mubr.bf16.gmra.mrb[0].mxu0 %v217
  %v358 = vpop.f32.mrb[0].mxu0
  %v359 = vadd.f32 %v242, %v358
  %v360 = vpop.f32.mrb[0].mxu0
  %v361 = vpop.f32.mrb[0].mxu0
  %v362 = vadd.f32 %v242, %v361
  %v363 = vpop.f32.mrb[0].mxu0
  %364 = vmatprep.mubr.bf16.mxu0 0
  %365 = vmatmul.mubr.bf16.gmra.mrb[0].mxu0 %v218
  %v366 = vpop.f32.mrb[0].mxu0
  %v367 = vadd.f32 %v242, %v366
  %v368 = vpop.f32.mrb[0].mxu0
  %v369 = vpop.f32.mrb[0].mxu0
  %v370 = vadd.f32 %v242, %v369
  %v371 = vpop.f32.mrb[0].mxu0
  %372 = vmatprep.mubr.bf16.mxu0 0
  %373 = vmatmul.mubr.bf16.gmra.mrb[0].mxu0 %v219
  %v374 = vpop.f32.mrb[0].mxu0
  %v375 = vadd.f32 %v242, %v374
  %v376 = vpop.f32.mrb[0].mxu0
  %v377 = vpop.f32.mrb[0].mxu0
  %v378 = vadd.f32 %v242, %v377
  %v379 = vpop.f32.mrb[0].mxu0
  %380 = vmatprep.mubr.bf16.mxu0 0
  %381 = vmatmul.mubr.bf16.gmra.mrb[0].mxu0 %v220
  %v382 = vpop.f32.mrb[0].mxu0
  %v383 = vadd.f32 %v242, %v382
  %v384 = vpop.f32.mrb[0].mxu0
  %v385 = vpop.f32.mrb[0].mxu0
  %v386 = vadd.f32 %v242, %v385
  %v387 = vpop.f32.mrb[0].mxu0
  %388 = vdwg.mxu0
  %v389 = vmax.f32 %v327, 0.0
  %v390 = vmax.f32 %v330, 0.0
  %v391 = vmax.f32 %v335, 0.0
  %v392 = vmax.f32 %v338, 0.0
  %v393 = vmax.f32 %v343, 0.0
  %v394 = vmax.f32 %v346, 0.0
  %v395 = vmax.f32 %v351, 0.0
  %v396 = vmax.f32 %v354, 0.0
  %v397 = vmax.f32 %v359, 0.0
  %v398 = vmax.f32 %v362, 0.0
  %v399 = vmax.f32 %v367, 0.0
  %v400 = vmax.f32 %v370, 0.0
  %v401 = vmax.f32 %v375, 0.0
  %v402 = vmax.f32 %v378, 0.0
  %v403 = vmax.f32 %v383, 0.0
  %v404 = vmax.f32 %v386, 0.0
  %v405 = vld [vmem:[%s5] sm:$0xf]
  %v406 = vpack.c.bf16 %v390, %v389
  %v407 = vpack.c.bf16 %v392, %v391
  %v408 = vpack.c.bf16 %v394, %v393
  %v409 = vpack.c.bf16 %v396, %v395
  %v410 = vpack.c.bf16 %v398, %v397
  %v411 = vpack.c.bf16 %v400, %v399
  %v412 = vpack.c.bf16 %v402, %v401
  %v413 = vpack.c.bf16 %v404, %v403
  %414 = vmatprep.subr.bf16.mxu0 0
  %415 = vmatpush1.bf16.xpose.msra.mxu0 %v406
  %416 = vmatprep.subr.bf16.mxu0 0
  %417 = vmatpush1.bf16.xpose.msra.mxu0 %v407
  %418 = vmatprep.subr.bf16.mxu0 0
  %419 = vmatpush1.bf16.xpose.msra.mxu0 %v408
  %420 = vmatprep.subr.bf16.mxu0 0
  %421 = vmatpush1.bf16.xpose.msra.mxu0 %v409
  %422 = vmatprep.subr.bf16.mxu0 0
  %423 = vmatpush1.bf16.xpose.msra.mxu0 %v410
  %424 = vmatprep.subr.bf16.mxu0 0
  %425 = vmatpush1.bf16.xpose.msra.mxu0 %v411
  %426 = vmatprep.subr.bf16.mxu0 0
  %427 = vmatpush1.bf16.xpose.msra.mxu0 %v412
  %428 = vmatprep.subr.bf16.mxu0 0
  %429 = vmatpush1.bf16.xpose.msra.mxu0 %v413
  %430 = vmatprep.subr.bf16.mxu0 0
  %431 = vmatpush1.bf16.xpose.msra.mxu0 0
  %432 = vmatprep.subr.bf16.mxu0 0
  %433 = vmatpush1.bf16.xpose.msra.mxu0 0
  %434 = vmatprep.subr.bf16.mxu0 0
  %435 = vmatpush1.bf16.xpose.msra.mxu0 0
  %436 = vmatprep.subr.bf16.mxu0 0
  %437 = vmatpush1.bf16.xpose.msra.mxu0 0
  %438 = vmatprep.subr.bf16.mxu0 0
  %439 = vmatpush1.bf16.xpose.msra.mxu0 0
  %440 = vmatprep.subr.bf16.mxu0 0
  %441 = vmatpush1.bf16.xpose.msra.mxu0 0
  %442 = vmatprep.subr.bf16.mxu0 0
  %443 = vmatpush1.bf16.xpose.msra.mxu0 0
  %444 = vmatprep.subr.bf16.mxu0 0
  %445 = vmatpush1.bf16.xpose.msra.mxu0 0
  %446 = vmatprep.mubr.bf16.mxu0 0
  %447 = vmatmul.mubr.bf16.gmra.mrb[0].mxu0 %v405
  %v448 = vpop.f32.mrb[0].mxu0
  %v449 = vadd.f32 0.0, %v448
  %v450 = vpop.f32.mrb[0].mxu0
  %v451 = vpop.f32.mrb[0].mxu0
  %v452 = vpop.f32.mrb[0].mxu0
  %453 = vdwg.mxu0
  %s454 = sld [smem:[#allocation2]]
  %v455 = vstv %s454
  %v456 = vadd.f32 %v449, %v455
  %457 = vst [vmem:[%s7] sm:$0x1] %v456
  // Predicated region
  $region30: #{mlp_forward.1} parent=0 // pred_check
    _
  $region31: #{mlp_forward.1} parent=0 // pred_check_branch
    %459 = sbr.rel (0) target = $region33
  $region32: #{mlp_forward.1} parent=0 // pred_region
    _
  $region33: #{mlp_forward.1} parent=0 // pred_fallthru
    _
  // Predicated region
  $region34: #{mlp_forward.1} parent=0 // pred_check
    _
  $region35: #{mlp_forward.1} parent=0 // pred_check_branch
    %461 = sbr.rel (0) target = $region37
  $region36: #{mlp_forward.1} parent=0 // pred_region
    _
  $region37: #{mlp_forward.1} parent=0 // pred_fallthru
    _

</llo_original>
